<compile_context>
chip_gen: v7x
topology: tpu7x:2x2x1
jax: 0.10.0
libtpu: 0.0.40
codegen_flags: <defaults>
</compile_context>

<pallas_src>
import functools
import math

import jax
import jax.numpy as jnp
from jax import lax
from jax.experimental import pallas as pl
from jax.experimental.pallas import tpu as pltpu


def _round_up(x, m):
    return ((x + m - 1) // m) * m


def _divisor_tiles(dim_p):
    """All multiples of 128 that evenly divide dim_p (dim_p is a 128-multiple)."""
    n = dim_p // 128
    return [128 * d for d in range(1, n + 1) if n % d == 0]


def _pick_tiles(Mp, Np, Kp, x_itemsize, w_itemsize, *,
                w_tile_budget_bytes, x_resident_max_bytes):
    """Choose (x_resident, tm, tn, tk) with no tile-multiple padding of N/K."""
    # Small-batch regime: keep x fully VMEM-resident and contract all of K in
    # one step (requires even the minimal 128-row weight tile to stay sane).
    x_resident = (Mp * Kp * x_itemsize <= x_resident_max_bytes
                  and 128 * Kp * w_itemsize <= 2 * w_tile_budget_bytes)
    if x_resident:
        tm, tk = Mp, Kp
    else:
        tm = min(256, Mp)
        tk = max(t for t in _divisor_tiles(Kp) if t <= 1024)

    # tn: largest 128-multiple divisor of Np whose weight tile fits the byte
    # budget, preferring an even number of N steps so the two v7x TensorCores
    # split the (only meaningful) parallel axis evenly.
    max_tn = max(128, w_tile_budget_bytes // (tk * w_itemsize))
    fitting = [t for t in _divisor_tiles(Np) if t <= max_tn] or [128]
    even = [t for t in fitting if (Np // t) % 2 == 0]
    tn = max(even) if even else max(fitting)
    return x_resident, tm, tn, tk


def rotation_kernel(x_ref, w_ref, o_ref, *, n_k):
    # x_ref: (tm, tk) activation tile (the whole padded activation when resident)
    # w_ref: (tn, tk) weight tile in native PyTorch (out, in) layout
    # o_ref: (tm, tn) f32 output tile; doubles as the K accumulator when n_k > 1
    #        (its block index is k-invariant, so it stays VMEM-resident).
    x = x_ref[...]
    w = w_ref[...]
    if w.dtype != x.dtype:
        x = x.astype(w.dtype)  # bf16-weight streaming path; accumulation stays f32

    # y = x @ W.T without materializing a transpose: contract the input-feature
    # dim of both operands directly on the MXU.
    # TODO(synk): confirm on a bundle dump that this NT contraction does not
    # lower to a per-step vxpose of the weight tile; if it does, pre-transpose
    # the static weight once at parameter-load time (hidden under DMA at small
    # batch, but relevant once the kernel turns MXU-bound at large batch).
    part = lax.dot_general(
        x, w,
        dimension_numbers=(((1,), (1,)), ((), ())),
        preferred_element_type=jnp.float32,
    )

    if n_k == 1:
        # Whole K contracted in one step: apply the epilogue directly.
        o_ref[...] = jnp.minimum(jnp.maximum(part, 0.01 * part), 1.0)
    else:
        k = pl.program_id(2)

        @pl.when(k == 0)
        def _():
            o_ref[...] = jnp.zeros_like(o_ref)

        o_ref[...] += part

        @pl.when(k == n_k - 1)
        def _():
            y = o_ref[...]
            y = jnp.maximum(y, 0.01 * y)   # leaky_relu, negative_slope=0.01
            o_ref[...] = jnp.minimum(y, 1.0)  # torch.clamp(..., max=1.0)


def rotation_nn_forward(x, weight, *,
                        w_tile_budget_bytes=4 * 1024 * 1024,
                        x_resident_max_bytes=2 * 1024 * 1024,
                        vmem_limit_bytes=32 * 1024 * 1024):
    """RotationNN forward: clamp(leaky_relu(x @ weight.T), max=1.0).

    x:      (B, S) activations.
    weight: (S, S) nn.Linear weight in native PyTorch (out_features, in_features)
            layout.  Pass a bf16 weight (cast once at parameter-load time) to
            halve the dominant HBM stream; in-kernel accumulation stays f32.
    """
    B, S = x.shape
    assert weight.shape == (S, S)
    x_itemsize = jnp.dtype(x.dtype).itemsize
    w_itemsize = jnp.dtype(weight.dtype).itemsize

    # Lane/sublane-dense padded problem: N/K go to the 128-lane quantum only
    # (never to the tile size); M to the 8-row sublane quantum (16 for
    # sub-32-bit weights so a casted x tile packs cleanly).
    m_quant = 8 if w_itemsize >= 4 else 16
    Np = Kp = _round_up(S, 128)
    Mp = _round_up(B, m_quant)

    x_resident, tm, tn, tk = _pick_tiles(
        Mp, Np, Kp, x_itemsize, w_itemsize,
        w_tile_budget_bytes=w_tile_budget_bytes,
        x_resident_max_bytes=x_resident_max_bytes)

    if x_resident:
        # Single (Mp, Kp) block, constant index -> DMA'd once, stays in VMEM.
        x_spec = pl.BlockSpec((Mp, Kp), lambda i, j, k: (0, 0))
    else:
        Mp = _round_up(Mp, tm)
        x_spec = pl.BlockSpec((tm, tk), lambda i, j, k: (i, k))

    # Pad only when actually required (zero-padding is exact for the matmul;
    # padded rows/cols are sliced off below).  For 128-multiple S the weight
    # pad is a no-op; otherwise pre-pad W once at parameter-load time to keep
    # it out of the per-call hot path.
    xp = x if (Mp, Kp) == (B, S) else jnp.pad(x, ((0, Mp - B), (0, Kp - S)))
    wp = weight if (Np, Kp) == (S, S) else jnp.pad(weight, ((0, Np - S), (0, Kp - S)))

    grid = (Mp // tm, Np // tn, Kp // tk)
    x_reads = 1 if x_resident else grid[1]  # resident x is streamed exactly once

    out = pl.pallas_call(
        functools.partial(rotation_kernel, n_k=grid[2]),
        out_shape=jax.ShapeDtypeStruct((Mp, Np), jnp.float32),
        grid_spec=pltpu.PrefetchScalarGridSpec(
            num_scalar_prefetch=0,
            grid=grid,
            in_specs=[
                x_spec,
                pl.BlockSpec((tn, tk), lambda i, j, k: (j, k)),
            ],
            out_specs=pl.BlockSpec((tm, tn), lambda i, j, k: (i, j)),
        ),
        compiler_params=pltpu.CompilerParams(
            dimension_semantics=("parallel", "parallel", "arbitrary"),
            vmem_limit_bytes=vmem_limit_bytes,
        ),
        cost_estimate=pl.CostEstimate(
            flops=2 * Mp * Np * Kp,
            transcendentals=0,
            bytes_accessed=(Np * Kp * w_itemsize            # weight, streamed once
                            + x_reads * Mp * Kp * x_itemsize
                            + Mp * Np * 4),
        ),
    )(xp, wp)

    out = out[:B, :S]
    return out if out.dtype == x.dtype else out.astype(x.dtype)


def _reference(x, weight):
    # High-precision plain-JAX reference of the same math (y = x @ W.T).
    y = lax.dot_general(
        x, weight.astype(jnp.float32),
        dimension_numbers=(((1,), (1,)), ((), ())),
        precision=lax.Precision.HIGHEST,
    )
    return jnp.minimum(jax.nn.leaky_relu(y, negative_slope=0.01), 1.0)


if __name__ == "__main__":
    key = jax.random.PRNGKey(0)

    # 1) Module's natural small shape (padding path: 32 -> 128).
    size, batch = 32, 8
    kx, kw, key = jax.random.split(key, 3)
    # Deterministic synthetic init matching _initialize_weights:
    # normal(mean=0, std=1/sqrt(size)) on the (out, in) Linear weight.
    weight = jax.random.normal(kw, (size, size), jnp.float32) / math.sqrt(size)
    x = jax.random.normal(kx, (batch, size), jnp.float32)
    out = rotation_nn_forward(x, weight)
    jax.block_until_ready(out)
    assert out.shape == (batch, size)
    assert jnp.allclose(out, _reference(x, weight), atol=1e-5, rtol=1e-5), \
        "mismatch vs reference (small)"

    # 2) 128-multiple S: zero padding, single weight tile, resident activation.
    size2, batch2 = 640, 16
    kx2, kw2, key = jax.random.split(key, 3)
    weight2 = jax.random.normal(kw2, (size2, size2), jnp.float32) / math.sqrt(size2)
    x2 = jax.random.normal(kx2, (batch2, size2), jnp.float32)
    out2 = rotation_nn_forward(x2, weight2)
    jax.block_until_ready(out2)
    assert out2.shape == (batch2, size2)
    assert jnp.allclose(out2, _reference(x2, weight2), atol=1e-4, rtol=1e-4), \
        "mismatch vs reference (640)"

    # 3) Multi-N-tile grid (gn=2, megacore-balanced) with resident x, full-K dot.
    size3, batch3 = 2048, 16
    kx3, kw3, key = jax.random.split(key, 3)
    weight3 = jax.random.normal(kw3, (size3, size3), jnp.float32) / math.sqrt(size3)
    x3 = jax.random.normal(kx3, (batch3, size3), jnp.float32)
    out3 = rotation_nn_forward(x3, weight3)
    jax.block_until_ready(out3)
    assert out3.shape == (batch3, size3)
    assert jnp.allclose(out3, _reference(x3, weight3), atol=5e-4, rtol=5e-4), \
        "mismatch vs reference (2048, resident)"

    # 4) Large batch: non-resident activation tiles + grid-level K accumulation.
    size4, batch4 = 2048, 1024
    kx4, kw4, key = jax.random.split(key, 3)
    weight4 = jax.random.normal(kw4, (size4, size4), jnp.float32) / math.sqrt(size4)
    x4 = jax.random.normal(kx4, (batch4, size4), jnp.float32)
    out4 = rotation_nn_forward(x4, weight4)
    jax.block_until_ready(out4)
    assert out4.shape == (batch4, size4)
    assert jnp.allclose(out4, _reference(x4, weight4), atol=5e-4, rtol=5e-4), \
        "mismatch vs reference (2048, tiled)"

    print("KERNEL_OK")
</pallas_src>

<mosaic_0001>
module attributes {stable_mosaic.version = 11 : i64} {
  func.func @rotation_kernel(%arg0: i32, %arg1: i32, %arg2: i32, %arg3: memref<8x128xf32, #tpu.memory_space<vmem>>, %arg4: memref<128x128xf32, #tpu.memory_space<vmem>>, %arg5: memref<8x128xf32, #tpu.memory_space<vmem>>) attributes {dimension_semantics = [#tpu.dimension_semantics<parallel>, #tpu.dimension_semantics<parallel>, #tpu.dimension_semantics<arbitrary>], iteration_bounds = array<i64: 1, 1, 1>, scalar_prefetch = 0 : i64, scratch_operands = 0 : i64, tpu.core_type = #tpu.core_type<tc>, window_params = [{pipeline_mode = #tpu.pipeline_mode<synchronous>, transform_indices = @transform_0, window_bounds = array<i64: 8, 128>}, {transform_indices = @transform_1, window_bounds = array<i64: 128, 128>}, {transform_indices = @transform_2, window_bounds = array<i64: 8, 128>}]} {
    %c0 = arith.constant 0 : index
    %c0_0 = arith.constant 0 : index
    %0 = vector.load %arg3[%c0, %c0_0] : memref<8x128xf32, #tpu.memory_space<vmem>>, vector<8x128xf32>
    %c0_1 = arith.constant 0 : index
    %c0_2 = arith.constant 0 : index
    %1 = vector.load %arg4[%c0_1, %c0_2] : memref<128x128xf32, #tpu.memory_space<vmem>>, vector<128x128xf32>
    %cst = arith.constant dense<0.000000e+00> : vector<8x128xf32>
    %2 = tpu.matmul %0, %1, %cst {dimension_numbers = #tpu.dot_dimension_numbers<[1], [1], [0], [0], [0, 0, 1, 0], [], []>} : vector<8x128xf32>, vector<128x128xf32>, vector<8x128xf32> -> vector<8x128xf32>
    %cst_3 = arith.constant 0.00999999977 : f32
    %3 = vector.broadcast %cst_3 : f32 to vector<8x128xf32>
    %4 = arith.mulf %3, %2 : vector<8x128xf32>
    %5 = arith.maximumf %2, %4 : vector<8x128xf32>
    %cst_4 = arith.constant 1.000000e+00 : f32
    %6 = vector.broadcast %cst_4 : f32 to vector<8x128xf32>
    %7 = arith.minimumf %5, %6 : vector<8x128xf32>
    %c0_5 = arith.constant 0 : index
    %c0_6 = arith.constant 0 : index
    %8 = vector.load %arg5[%c0_5, %c0_6] : memref<8x128xf32, #tpu.memory_space<vmem>>, vector<8x128xf32>
    tpu.vector_store %arg5[%c0_5, %c0_6], %7 {strides = array<i32>} : memref<8x128xf32, #tpu.memory_space<vmem>>, vector<8x128xf32>,
    return
  }
  func.func @transform_0(%arg0: i32, %arg1: i32, %arg2: i32) -> (i32, i32) {
    %c0_i32 = arith.constant 0 : i32
    %c0_i32_0 = arith.constant 0 : i32
    %c0_i32_1 = arith.constant 0 : i32
    return %c0_i32, %c0_i32_0 : i32, i32
  }
  func.func @transform_1(%arg0: i32, %arg1: i32, %arg2: i32) -> (i32, i32) {
    %c0_i32 = arith.constant 0 : i32
    return %arg1, %arg2 : i32, i32
  }
  func.func @transform_2(%arg0: i32, %arg1: i32, %arg2: i32) -> (i32, i32) {
    %c0_i32 = arith.constant 0 : i32
    return %arg0, %arg1 : i32, i32
  }
}

</mosaic_0001>

<llo_original>
// kernel: tpu_custom_call.1
$region0: #{tpu_custom_call.1}
  #allocation0 [shape = 'u32[]', space=smem, size = 0x4, offset = 0x4, fixed_abs, tag = 'smem constant byte address 0x4 - core index']
  #allocation1 [shape = 'u32[144,128]{1,0:T(1,128)}', space=vmem, size = 0x12000, scoped, tag = 'internal scratch']
  %s0 = inlined_call_operand.hbm [shape: f32[8,128], index: 0, kind: input, shape index: {}]
  %s1 = inlined_call_operand.hbm [shape: f32[128,128], index: 1, kind: input, shape index: {}]
  %s2 = inlined_call_operand.hbm [shape: f32[8,128], index: 2, kind: output, shape index: {}]
  %s3 = sld [smem:[#allocation0]]
  $region26: #{tpu_custom_call.1} parent=0
    _
  %s5 = ssub.s32 1, %s3
  %s6 = scalar_select 0, %s5, %s3
  $region1: #{tpu_custom_call.1} parent=0
    #allocation2 [shape = 'u8[4096]{0}', space=vmem, size = 0x1000, scoped, tag = 'input window, operand 0, single buffered']
    #allocation3 [shape = 's32[1]{0}', space=sflag, size = 0x4, scoped, tag = 'scoped memory for tpu_custom_call.1']
    #allocation4 [shape = 's32[1]{0}', space=sflag, size = 0x4, scoped, tag = 'scoped memory for tpu_custom_call.1']
    #allocation5 [shape = 'u8[65536]{0}', space=vmem, size = 0x10000, scoped, tag = 'input window, operand 1, single buffered']
    #allocation6 [shape = 's32[1]{0}', space=sflag, size = 0x4, scoped, tag = 'scoped memory for tpu_custom_call.1']
    #allocation7 [shape = 'u8[4096]{0}', space=vmem, size = 0x1000, scoped, tag = 'output window, operand 0, single buffered']
    %7 = vsyncpa [#allocation3], 0
    %8 = vsyncpa [#allocation6], 0
    %9 = vsyncpa [#allocation4], 0
    // Predicated region
    $region2: #{tpu_custom_call.1} parent=1 // pred_check
      _
    $region3: #{tpu_custom_call.1} parent=1 // pred_check_branch
      %11 = sbr.rel (0) target = $region5
    $region4: #{tpu_custom_call.1} parent=1 // pred_region
      %s13 = ssub.s32 128, 128
      %14 = vsyncadd [#allocation3], %s13
      %s16 = sshll.u32 [#allocation2], 4
      %s17 = int_to_ptr.vmem [resolvable:$true] %s16
      %19 = dma.hbm_to_vmem [thread:$0]  %s0, 128, %s17, [#allocation3]
    $region5: #{tpu_custom_call.1} parent=1 // pred_fallthru
      _
    // Predicated region
    $region6: #{tpu_custom_call.1} parent=1 // pred_check
      _
    $region7: #{tpu_custom_call.1} parent=1 // pred_check_branch
      %21 = sbr.rel (0) target = $region9
    $region8: #{tpu_custom_call.1} parent=1 // pred_region
      %s23 = ssub.s32 2048, 2048
      %24 = vsyncadd [#allocation6], %s23
      %s25 = sshll.u32 [#allocation5], 4
      %s26 = int_to_ptr.vmem [resolvable:$true] %s25
      %31 = dma.hbm_to_vmem [thread:$0]  %s1, 2048, %s26, [#allocation6], 128, 128, 8
    $region9: #{tpu_custom_call.1} parent=1 // pred_fallthru
      _
    // Predicated region
    $region10: #{tpu_custom_call.1} parent=1 // pred_check
      _
    $region11: #{tpu_custom_call.1} parent=1 // pred_check_branch
      %33 = sbr.rel (0) target = $region13
    $region12: #{tpu_custom_call.1} parent=1 // pred_region
      %34 = dma.done [#allocation3], 128
    $region13: #{tpu_custom_call.1} parent=1 // pred_fallthru
      _
    // Predicated region
    $region14: #{tpu_custom_call.1} parent=1 // pred_check
      _
    $region15: #{tpu_custom_call.1} parent=1 // pred_check_branch
      %36 = sbr.rel (0) target = $region17
    $region16: #{tpu_custom_call.1} parent=1 // pred_region
      %37 = dma.done [#allocation6], 2048
    $region17: #{tpu_custom_call.1} parent=1 // pred_fallthru
      _
    %v38 = vld [vmem:[#allocation2] sm:$0xff]
    %v39 = vld [vmem:[#allocation5] sm:$0xff]
    %v40 = vld [vmem:[#allocation5 + $0x8] sm:$0xff]
    %v41 = vld [vmem:[#allocation5 + $0x10] sm:$0xff]
    %v42 = vld [vmem:[#allocation5 + $0x18] sm:$0xff]
    %v43 = vld [vmem:[#allocation5 + $0x20] sm:$0xff]
    %v44 = vld [vmem:[#allocation5 + $0x28] sm:$0xff]
    %v45 = vld [vmem:[#allocation5 + $0x30] sm:$0xff]
    %v46 = vld [vmem:[#allocation5 + $0x38] sm:$0xff]
    %v47 = vld [vmem:[#allocation5 + $0x40] sm:$0xff]
    %v48 = vld [vmem:[#allocation5 + $0x48] sm:$0xff]
    %v49 = vld [vmem:[#allocation5 + $0x50] sm:$0xff]
    %v50 = vld [vmem:[#allocation5 + $0x58] sm:$0xff]
    %v51 = vld [vmem:[#allocation5 + $0x60] sm:$0xff]
    %v52 = vld [vmem:[#allocation5 + $0x68] sm:$0xff]
    %v53 = vld [vmem:[#allocation5 + $0x70] sm:$0xff]
    %v54 = vld [vmem:[#allocation5 + $0x78] sm:$0xff]
    %55 = vmatprep.subr.mxu0 0.0
    %56 = vmatpush1.xpose.msra.mxu0 %v39
    %57 = vmatprep.subr.mxu0 0.0
    %58 = vmatpush1.xpose.msra.mxu0 %v40
    %59 = vmatprep.subr.mxu0 0.0
    %60 = vmatpush1.xpose.msra.mxu0 %v41
    %61 = vmatprep.subr.mxu0 0.0
    %62 = vmatpush1.xpose.msra.mxu0 %v42
    %63 = vmatprep.subr.mxu0 0.0
    %64 = vmatpush1.xpose.msra.mxu0 %v43
    %65 = vmatprep.subr.mxu0 0.0
    %66 = vmatpush1.xpose.msra.mxu0 %v44
    %67 = vmatprep.subr.mxu0 0.0
    %68 = vmatpush1.xpose.msra.mxu0 %v45
    %69 = vmatprep.subr.mxu0 0.0
    %70 = vmatpush1.xpose.msra.mxu0 %v46
    %71 = vmatprep.subr.mxu0 0.0
    %72 = vmatpush1.xpose.msra.mxu0 %v47
    %73 = vmatprep.subr.mxu0 0.0
    %74 = vmatpush1.xpose.msra.mxu0 %v48
    %75 = vmatprep.subr.mxu0 0.0
    %76 = vmatpush1.xpose.msra.mxu0 %v49
    %77 = vmatprep.subr.mxu0 0.0
    %78 = vmatpush1.xpose.msra.mxu0 %v50
    %79 = vmatprep.subr.mxu0 0.0
    %80 = vmatpush1.xpose.msra.mxu0 %v51
    %81 = vmatprep.subr.mxu0 0.0
    %82 = vmatpush1.xpose.msra.mxu0 %v52
    %83 = vmatprep.subr.mxu0 0.0
    %84 = vmatpush1.xpose.msra.mxu0 %v53
    %85 = vmatprep.subr.mxu0 0.0
    %86 = vmatpush1.xpose.msra.mxu0 %v54
    %87 = vmatprep.subr.mxu0 0.0
    %88 = vmatpush1.xpose.msra.mxu0 0.0
    %89 = vmatprep.subr.mxu0 0.0
    %90 = vmatpush1.xpose.msra.mxu0 0.0
    %91 = vmatprep.subr.mxu0 0.0
    %92 = vmatpush1.xpose.msra.mxu0 0.0
    %93 = vmatprep.subr.mxu0 0.0
    %94 = vmatpush1.xpose.msra.mxu0 0.0
    %95 = vmatprep.subr.mxu0 0.0
    %96 = vmatpush1.xpose.msra.mxu0 0.0
    %97 = vmatprep.subr.mxu0 0.0
    %98 = vmatpush1.xpose.msra.mxu0 0.0
    %99 = vmatprep.subr.mxu0 0.0
    %100 = vmatpush1.xpose.msra.mxu0 0.0
    %101 = vmatprep.subr.mxu0 0.0
    %102 = vmatpush1.xpose.msra.mxu0 0.0
    %103 = vmatprep.subr.mxu0 0.0
    %104 = vmatpush1.xpose.msra.mxu0 0.0
    %105 = vmatprep.subr.mxu0 0.0
    %106 = vmatpush1.xpose.msra.mxu0 0.0
    %107 = vmatprep.subr.mxu0 0.0
    %108 = vmatpush1.xpose.msra.mxu0 0.0
    %109 = vmatprep.subr.mxu0 0.0
    %110 = vmatpush1.xpose.msra.mxu0 0.0
    %111 = vmatprep.subr.mxu0 0.0
    %112 = vmatpush1.xpose.msra.mxu0 0.0
    %113 = vmatprep.subr.mxu0 0.0
    %114 = vmatpush1.xpose.msra.mxu0 0.0
    %115 = vmatprep.subr.mxu0 0.0
    %116 = vmatpush1.xpose.msra.mxu0 0.0
    %117 = vmatprep.subr.mxu0 0.0
    %118 = vmatpush1.xpose.msra.mxu0 0.0
    %119 = vmatprep.mubr.f32.mxu0 0.0
    %120 = vmatmul.mubr.f32.gmra.mrb[0].mxu0 %v38
    %v121 = vpop.f32.mrb[0].mxu0
    %v122 = vadd.f32 0.0, %v121
    %v123 = vpop.f32.mrb[0].mxu0
    %124 = vdwg.mxu0
    %v125 = vmul.f32 %v122, 0.01
    %v126 = vmax.f32 %v122, %v125
    %v127 = vmin.f32 %v126, 1.0
    %128 = vst [vmem:[#allocation7] sm:$0xff] %v127
    // Predicated region
    $region18: #{tpu_custom_call.1} parent=1 // pred_check
      _
    $region19: #{tpu_custom_call.1} parent=1 // pred_check_branch
      %130 = sbr.rel (0) target = $region21
    $region20: #{tpu_custom_call.1} parent=1 // pred_region
      %s132 = ssub.s32 128, 128
      %133 = vsyncadd [#allocation4], %s132
      %s135 = sshll.u32 [#allocation7], 4
      %s136 = int_to_ptr.vmem [resolvable:$true] %s135
      %138 = dma.vmem_to_hbm [thread:$0]  %s136, 128, %s2, [#allocation4]
    $region21: #{tpu_custom_call.1} parent=1 // pred_fallthru
      _
    // Predicated region
    $region22: #{tpu_custom_call.1} parent=1 // pred_check
      _
    $region23: #{tpu_custom_call.1} parent=1 // pred_check_branch
      %140 = sbr.rel (0) target = $region25
    $region24: #{tpu_custom_call.1} parent=1 // pred_region
      %141 = dma.done [#allocation4], 128
    $region25: #{tpu_custom_call.1} parent=1 // pred_fallthru
      _
    %142 = vsyncpa [#allocation3], 1
    %143 = vsyncpa [#allocation6], 1
    %144 = vsyncpa [#allocation4], 1

</llo_original>
